<compile_context>
chip_gen: v6e
topology: v6e:2x2x1
jax: 0.10.0
libtpu: 0.0.40
codegen_flags: <defaults>
</compile_context>

<pallas_src>
import numpy as np
import jax
import jax.numpy as jnp
from jax import lax
from jax.experimental import pallas as pl
from jax.experimental.pallas import tpu as pltpu


# ----------------------------------------------------------------------------
# Analytic filter construction (mirrors Resampler.__init__).
# ----------------------------------------------------------------------------
def _build_resampler_filter(input_sr, output_sr, num_zeros=64, cutoff_ratio=0.95,
                            filt='kaiser', beta=14.0):
    def gcd(a, b):
        return a if b == 0 else gcd(b, a % b)

    d = gcd(input_sr, output_sr)
    input_sr, output_sr = input_sr // d, output_sr // d
    assert num_zeros > 3
    assert filt in ['hann', 'kaiser', 'kaiser_best', 'kaiser_fast']
    if filt == 'kaiser_best':
        num_zeros, beta, cutoff_ratio, filt = 64, 14.769656459379492, 0.9475937167399596, 'kaiser'
    elif filt == 'kaiser_fast':
        num_zeros, beta, cutoff_ratio, filt = 16, 8.555504641634386, 0.85, 'kaiser'

    zeros_per_block = min(input_sr, output_sr) * cutoff_ratio
    blocks_per_side = int(np.ceil(num_zeros / zeros_per_block))
    kernel_width = 2 * blocks_per_side + 1
    window_radius_in_blocks = blocks_per_side

    times = (np.arange(output_sr, dtype=np.float32).reshape((output_sr, 1, 1)) / output_sr
             - np.arange(input_sr, dtype=np.float32).reshape((1, input_sr, 1)) / input_sr
             - (np.arange(kernel_width, dtype=np.float32).reshape((1, 1, kernel_width))
                - blocks_per_side))

    def hann_window(a):
        return np.heaviside(1 - np.abs(a), 0.0) * (0.5 + 0.5 * np.cos(a * np.pi))

    def kaiser_window(a, b):
        w = np.i0(b * np.sqrt(np.clip(1 - (a / 1.0) ** 2.0, 0.0, 1.0))) / np.i0(b)
        return np.heaviside(1 - np.abs(a), 0.0) * w

    if filt == 'hann':
        weights = (np.sinc(times * zeros_per_block)
                   * hann_window(times / window_radius_in_blocks)
                   * zeros_per_block / input_sr)
    else:
        weights = (np.sinc(times * zeros_per_block)
                   * kaiser_window(times / window_radius_in_blocks, beta)
                   * zeros_per_block / input_sr)

    weights = np.asarray(weights, dtype=np.float32)
    assert weights.shape == (output_sr, input_sr, kernel_width)
    return input_sr, output_sr, blocks_per_side, kernel_width, weights


# ----------------------------------------------------------------------------
# Pack the (C_out, C_in, K) filter into block-banded matmul weights.
#   out[o, r*D + delta] = sum_{c} window[r, c] * Wband[c + padC, delta*C_out + o]
# where window row r holds raw samples [r*Drow - padC, (r+1)*Drow + padC).
# Split into  Wl (left halo, padC rows) | Wc (center, Drow rows) | Wr (right halo, padC rows).
# ----------------------------------------------------------------------------
def _pack_band_weights(w, c_in, c_out, pad, K, D):
    Drow = D * c_in
    DCout = D * c_out
    padC = pad * c_in
    KC = K * c_in
    wf = np.transpose(w, (0, 2, 1)).reshape(c_out, KC)          # wf[o, k*c_in + i] = w[o, i, k]
    Wfull = np.zeros((Drow + 2 * padC, DCout), dtype=np.float32)
    for d in range(D):
        Wfull[d * c_in: d * c_in + KC, d * c_out:(d + 1) * c_out] = wf.T
    return Wfull[:padC], Wfull[padC:padC + Drow], Wfull[padC + Drow:]


# ----------------------------------------------------------------------------
# Kernel factory: one grid step = one (batch row, row-tile) pair.
# ----------------------------------------------------------------------------
def _make_kernel(nV, Drow, padC, last_row, last_col):
    def kernel(x_ref, prev_ref, next_ref, wl_ref, wc_ref, wr_ref, o_ref):
        t = pl.program_id(1)
        r0 = t * nV                                             # first global row of this tile

        main = x_ref[0].astype(jnp.float32)                     # (nV, Drow)
        prev = prev_ref[0, 7:8, :].astype(jnp.float32)          # (1, Drow): global row r0-1
        nxt = next_ref[0, 0:1, :].astype(jnp.float32)           # (1, Drow): global row r0+nV

        # Truncation / zero-padding semantics handled in-kernel:
        # raw index (row*Drow + col) must be < num_blocks*C_in, else treated as 0.
        rows = lax.broadcasted_iota(jnp.int32, (nV, Drow), 0) + r0
        cols = lax.broadcasted_iota(jnp.int32, (nV, Drow), 1)
        valid = (rows < last_row) | ((rows == last_row) & (cols < last_col))
        main = jnp.where(valid, main, 0.0)

        ncols = lax.broadcasted_iota(jnp.int32, (1, Drow), 1)
        nrow = r0 + nV
        nvalid = (nrow < last_row) | ((nrow == last_row) & (ncols < last_col))
        nxt = jnp.where(nvalid, nxt, 0.0)

        prev = jnp.where(t > 0, prev, 0.0)                      # left zero-padding of the conv

        # Halo operands: row v uses the tail of row v-1 and the head of row v+1.
        l_left = jnp.concatenate([prev[:, Drow - padC:], main[:-1, Drow - padC:]], axis=0)
        l_right = jnp.concatenate([main[1:, :padC], nxt[:, :padC]], axis=0)

        # All K taps fused into banded matmuls (MXU), f32 accumulation.
        acc = jnp.dot(main, wc_ref[...], preferred_element_type=jnp.float32)
        acc = acc + jnp.dot(l_left, wl_ref[...], preferred_element_type=jnp.float32)
        acc = acc + jnp.dot(l_right, wr_ref[...], preferred_element_type=jnp.float32)

        o_ref[0] = acc.astype(o_ref.dtype)                      # (nV, D*C_out), interleaved output

    return kernel


def _cdiv(a, b):
    return -(-a // b)


# ----------------------------------------------------------------------------
# Wrapper: general resample path.
# ----------------------------------------------------------------------------
def _general_resample_pallas(data, Wl, Wc, Wr, c_in, c_out, pad, D, max_rows=512):
    B, seq = data.shape
    num_blocks = seq // c_in
    if num_blocks == 0:
        raise RuntimeError('Signal is too short to resample')

    Drow = D * c_in
    DCout = D * c_out
    padC = pad * c_in
    Lv = num_blocks * c_in

    R_in = _cdiv(seq, Drow)
    if R_in * Drow != seq:
        # Only hit when seq is not a multiple of D*input_sr (the in-kernel mask enforces exact
        # truncation semantics; this pad only makes the free reshape below legal).
        data = jnp.pad(data, ((0, 0), (0, R_in * Drow - seq)))
    x3 = data.reshape(B, R_in, Drow)                             # free view of the raw signal

    rows_out = _cdiv(num_blocks, D)
    nV = min(max_rows, rows_out)
    nV = _cdiv(nV, 8) * 8                                        # sublane-friendly tile height
    nT = _cdiv(rows_out, nV)
    nV8 = nV // 8
    nblk8 = _cdiv(R_in, 8)

    kernel = _make_kernel(nV, Drow, padC, Lv // Drow, Lv % Drow)

    in_specs = [
        pl.BlockSpec((1, nV, Drow), lambda b, t: (b, t, 0)),                       # main tile
        pl.BlockSpec((1, 8, Drow),
                     lambda b, t: (b, jnp.maximum(t * nV8 - 1, 0), 0)),            # prev-row halo
        pl.BlockSpec((1, 8, Drow),
                     lambda b, t: (b, jnp.minimum((t + 1) * nV8, nblk8 - 1), 0)),  # next-row halo
        pl.BlockSpec(Wl.shape, lambda b, t: (0, 0)),
        pl.BlockSpec(Wc.shape, lambda b, t: (0, 0)),
        pl.BlockSpec(Wr.shape, lambda b, t: (0, 0)),
    ]
    out_spec = pl.BlockSpec((1, nV, DCout), lambda b, t: (b, t, 0))

    y3 = pl.pallas_call(
        kernel,
        out_shape=jax.ShapeDtypeStruct((B, rows_out, DCout), data.dtype),
        grid=(B, nT),
        in_specs=in_specs,
        out_specs=out_spec,
        compiler_params=pltpu.CompilerParams(
            dimension_semantics=("parallel", "parallel")),
    )(x3, x3, x3, Wl, Wc, Wr)

    y = y3.reshape(B, rows_out * DCout)                          # free: output already interleaved
    if rows_out * D != num_blocks:
        # TODO(synk): tail trim copies the output; choose seq with num_blocks % D == 0 to avoid it.
        y = y[:, :num_blocks * c_out]
    return y


# ----------------------------------------------------------------------------
# Module-equivalent wrapper.
# ----------------------------------------------------------------------------
class ResamplerPallas:
    def __init__(self, input_sr, output_sr, dtype=jnp.float32, num_zeros=64,
                 cutoff_ratio=0.95, filt='kaiser', beta=14.0, max_rows_per_tile=512):
        assert isinstance(input_sr, int) and isinstance(output_sr, int)
        assert max_rows_per_tile >= 8 and max_rows_per_tile % 8 == 0
        if input_sr == output_sr:
            self.resample_type = 'trivial'
            return
        in_sr, out_sr, pad, K, w = _build_resampler_filter(
            input_sr, output_sr, num_zeros=num_zeros, cutoff_ratio=cutoff_ratio,
            filt=filt, beta=beta)
        if out_sr == 1 or in_sr == 1:
            # TODO(synk): integer_downsample / integer_upsample strided-conv paths not ported.
            raise NotImplementedError("integer up/down-sample paths not implemented")
        self.resample_type = 'general'
        self.input_sr = in_sr
        self.output_sr = out_sr
        self.padding = pad
        self.kernel_width = K
        self.max_rows_per_tile = max_rows_per_tile

        # D time-blocks per output row; halo must fit in one neighbouring row.
        D = 64
        while D < pad:
            D *= 2
        self.D = D

        # Filter kept in float32 regardless of `dtype` (activations are cast in-kernel).
        self.weights = jnp.asarray(w, dtype=jnp.float32)         # (C_out, C_in, K), for reference
        Wl, Wc, Wr = _pack_band_weights(w, in_sr, out_sr, pad, K, D)
        self.Wl = jnp.asarray(Wl)
        self.Wc = jnp.asarray(Wc)
        self.Wr = jnp.asarray(Wr)

    def __call__(self, data):
        if self.resample_type == 'trivial':
            return data
        return _general_resample_pallas(data, self.Wl, self.Wc, self.Wr,
                                        self.input_sr, self.output_sr,
                                        self.padding, self.D,
                                        max_rows=self.max_rows_per_tile)


# ----------------------------------------------------------------------------
# Pure-JAX reference (direct K-tap conv) for correctness checking.
# ----------------------------------------------------------------------------
def _reference_general(data, weights, input_sr, output_sr, padding):
    B, seq_len = data.shape
    nb = seq_len // input_sr
    x = jnp.transpose(data[:, :nb * input_sr].reshape(B, nb, input_sr), (0, 2, 1))
    x = x.astype(jnp.float32)
    xp = jnp.pad(x, ((0, 0), (0, 0), (padding, padding)))
    O, I, K = weights.shape
    out = jnp.zeros((B, O, nb), jnp.float32)
    for k in range(K):
        out = out + jnp.einsum('oi,bit->bot', weights[:, :, k], xp[:, :, k:k + nb],
                               precision='highest')
    return jnp.transpose(out, (0, 2, 1)).reshape(B, nb * O).astype(data.dtype)


if __name__ == "__main__":
    # 2 -> 3 resampling ('general' path), small kaiser filter (pad=5, K=11).
    # max_rows_per_tile=32 keeps the demo small while still spanning 4 time tiles
    # (production default is 512 rows = 32768 time blocks per tile).
    res = ResamplerPallas(2, 3, dtype=jnp.float32, num_zeros=8,
                          cutoff_ratio=0.95, filt='kaiser', beta=14.0,
                          max_rows_per_tile=32)

    key = jax.random.PRNGKey(0)
    k1, k2 = jax.random.split(key)

    # Case 1: multi-tile, evenly divisible sizes (no wrapper pad / trim, pure-view reshapes).
    data1 = jax.random.normal(k1, (2, 16384), dtype=jnp.float32)
    out1 = jax.block_until_ready(res(data1))
    ref1 = jax.block_until_ready(_reference_general(data1, res.weights, res.input_sr,
                                                    res.output_sr, res.padding))
    assert out1.shape == (2, (16384 // 2) * 3), out1.shape
    np.testing.assert_allclose(np.asarray(out1), np.asarray(ref1), rtol=1e-4, atol=1e-5)

    # Case 2: odd / non-divisible length -> exercises truncation and in-kernel edge masking.
    data2 = jax.random.normal(k2, (1, 1001), dtype=jnp.float32)
    out2 = jax.block_until_ready(res(data2))
    ref2 = jax.block_until_ready(_reference_general(data2, res.weights, res.input_sr,
                                                    res.output_sr, res.padding))
    assert out2.shape == (1, (1001 // 2) * 3), out2.shape
    np.testing.assert_allclose(np.asarray(out2), np.asarray(ref2), rtol=1e-4, atol=1e-5)

    print("KERNEL_OK")
</pallas_src>

<mosaic_0001>
module attributes {stable_mosaic.version = 11 : i64} {
  func.func @kernel(%arg0: i32, %arg1: i32, %arg2: memref<1x32x128xf32, #tpu.memory_space<vmem>>, %arg3: memref<1x8x128xf32, #tpu.memory_space<vmem>>, %arg4: memref<1x8x128xf32, #tpu.memory_space<vmem>>, %arg5: memref<10x192xf32, #tpu.memory_space<vmem>>, %arg6: memref<128x192xf32, #tpu.memory_space<vmem>>, %arg7: memref<10x192xf32, #tpu.memory_space<vmem>>, %arg8: memref<1x32x192xf32, #tpu.memory_space<vmem>>) attributes {dimension_semantics = [#tpu.dimension_semantics<parallel>, #tpu.dimension_semantics<parallel>], iteration_bounds = array<i64: 2, 4>, scalar_prefetch = 0 : i64, scratch_operands = 0 : i64, tpu.core_type = #tpu.core_type<tc>, window_params = [{transform_indices = @transform_0, window_bounds = array<i64: 1, 32, 128>}, {transform_indices = @transform_1, window_bounds = array<i64: 1, 8, 128>}, {transform_indices = @transform_2, window_bounds = array<i64: 1, 8, 128>}, {pipeline_mode = #tpu.pipeline_mode<synchronous>, transform_indices = @transform_3, window_bounds = array<i64: 10, 192>}, {pipeline_mode = #tpu.pipeline_mode<synchronous>, transform_indices = @transform_4, window_bounds = array<i64: 128, 192>}, {pipeline_mode = #tpu.pipeline_mode<synchronous>, transform_indices = @transform_5, window_bounds = array<i64: 10, 192>}, {transform_indices = @transform_6, window_bounds = array<i64: 1, 32, 192>}]} {
    %c32_i32 = arith.constant 32 : i32
    %0 = arith.muli %arg1, %c32_i32 : i32
    %c0 = arith.constant 0 : index
    %c0_0 = arith.constant 0 : index
    %c0_1 = arith.constant 0 : index
    %1 = vector.load %arg2[%c0, %c0_0, %c0_1] : memref<1x32x128xf32, #tpu.memory_space<vmem>>, vector<1x32x128xf32>
    %2 = vector.shape_cast %1 : vector<1x32x128xf32> to vector<32x128xf32>
    %c0_2 = arith.constant 0 : index
    %c7 = arith.constant 7 : index
    %c0_3 = arith.constant 0 : index
    %3 = vector.load %arg3[%c0_2, %c7, %c0_3] : memref<1x8x128xf32, #tpu.memory_space<vmem>>, vector<1x1x128xf32>
    %4 = vector.shape_cast %3 : vector<1x1x128xf32> to vector<1x128xf32>
    %c0_4 = arith.constant 0 : index
    %c0_5 = arith.constant 0 : index
    %c0_6 = arith.constant 0 : index
    %5 = vector.load %arg4[%c0_4, %c0_5, %c0_6] : memref<1x8x128xf32, #tpu.memory_space<vmem>>, vector<1x1x128xf32>
    %6 = vector.shape_cast %5 : vector<1x1x128xf32> to vector<1x128xf32>
    %7 = tpu.iota {dimensions = array<i32: 0>} : vector<32x128xi32>
    %8 = vector.broadcast %0 : i32 to vector<32x128xi32>
    %9 = arith.addi %7, %8 : vector<32x128xi32>
    %10 = tpu.iota {dimensions = array<i32: 1>} : vector<32x128xi32>
    %c128_i32 = arith.constant 128 : i32
    %11 = vector.broadcast %c128_i32 : i32 to vector<32x128xi32>
    %12 = arith.cmpi slt, %9, %11 : vector<32x128xi32>
    %c128_i32_7 = arith.constant 128 : i32
    %13 = vector.broadcast %c128_i32_7 : i32 to vector<32x128xi32>
    %14 = arith.cmpi eq, %9, %13 : vector<32x128xi32>
    %c0_i32 = arith.constant 0 : i32
    %15 = vector.broadcast %c0_i32 : i32 to vector<32x128xi32>
    %16 = arith.cmpi slt, %10, %15 : vector<32x128xi32>
    %17 = arith.andi %14, %16 : vector<32x128xi1>
    %18 = arith.ori %12, %17 : vector<32x128xi1>
    %cst = arith.constant 0.000000e+00 : f32
    %19 = vector.broadcast %cst : f32 to vector<32x128xf32>
    %20 = arith.select %18, %2, %19 : vector<32x128xi1>, vector<32x128xf32>
    %21 = tpu.iota {dimensions = array<i32: 1>} : vector<1x128xi32>
    %c32_i32_8 = arith.constant 32 : i32
    %22 = arith.addi %0, %c32_i32_8 : i32
    %c128_i32_9 = arith.constant 128 : i32
    %23 = arith.cmpi slt, %22, %c128_i32_9 : i32
    %c128_i32_10 = arith.constant 128 : i32
    %24 = arith.cmpi eq, %22, %c128_i32_10 : i32
    %c0_i32_11 = arith.constant 0 : i32
    %25 = vector.broadcast %c0_i32_11 : i32 to vector<1x128xi32>
    %26 = arith.cmpi slt, %21, %25 : vector<1x128xi32>
    %27 = vector.broadcast %24 : i1 to vector<1x128xi1>
    %28 = arith.andi %27, %26 : vector<1x128xi1>
    %29 = vector.broadcast %23 : i1 to vector<1x128xi1>
    %30 = arith.ori %29, %28 : vector<1x128xi1>
    %cst_12 = arith.constant 0.000000e+00 : f32
    %31 = vector.broadcast %cst_12 : f32 to vector<1x128xf32>
    %32 = arith.select %30, %6, %31 : vector<1x128xi1>, vector<1x128xf32>
    %c0_i32_13 = arith.constant 0 : i32
    %33 = arith.cmpi sgt, %arg1, %c0_i32_13 : i32
    %cst_14 = arith.constant 0.000000e+00 : f32
    %34 = vector.broadcast %cst_14 : f32 to vector<1x128xf32>
    %35 = arith.select %33, %4, %34 : vector<1x128xf32>
    %36 = vector.extract_strided_slice %35 {offsets = [0, 118], sizes = [1, 10], strides = [1, 1]} : vector<1x128xf32> to vector<1x10xf32>
    %37 = vector.extract_strided_slice %20 {offsets = [0, 118], sizes = [31, 10], strides = [1, 1]} : vector<32x128xf32> to vector<31x10xf32>
    %38 = tpu.concatenate %36, %37 in 0 : vector<1x10xf32>, vector<31x10xf32> -> vector<32x10xf32>
    %39 = vector.extract_strided_slice %20 {offsets = [1, 0], sizes = [31, 10], strides = [1, 1]} : vector<32x128xf32> to vector<31x10xf32>
    %40 = vector.extract_strided_slice %32 {offsets = [0, 0], sizes = [1, 10], strides = [1, 1]} : vector<1x128xf32> to vector<1x10xf32>
    %41 = tpu.concatenate %39, %40 in 0 : vector<31x10xf32>, vector<1x10xf32> -> vector<32x10xf32>
    %c0_15 = arith.constant 0 : index
    %c0_16 = arith.constant 0 : index
    %42 = vector.load %arg6[%c0_15, %c0_16] : memref<128x192xf32, #tpu.memory_space<vmem>>, vector<128x192xf32>
    %cst_17 = arith.constant dense<0.000000e+00> : vector<32x192xf32>
    %43 = tpu.matmul %20, %42, %cst_17 {dimension_numbers = #tpu.dot_dimension_numbers<[1], [0], [0], [1], [0, 0, 1, 1], [], []>} : vector<32x128xf32>, vector<128x192xf32>, vector<32x192xf32> -> vector<32x192xf32>
    %c0_18 = arith.constant 0 : index
    %c0_19 = arith.constant 0 : index
    %44 = vector.load %arg5[%c0_18, %c0_19] : memref<10x192xf32, #tpu.memory_space<vmem>>, vector<10x192xf32>
    %cst_20 = arith.constant dense<0.000000e+00> : vector<32x192xf32>
    %45 = tpu.matmul %38, %44, %cst_20 {dimension_numbers = #tpu.dot_dimension_numbers<[1], [0], [0], [1], [0, 0, 1, 1], [], []>} : vector<32x10xf32>, vector<10x192xf32>, vector<32x192xf32> -> vector<32x192xf32>
    %46 = arith.addf %43, %45 : vector<32x192xf32>
    %c0_21 = arith.constant 0 : index
    %c0_22 = arith.constant 0 : index
    %47 = vector.load %arg7[%c0_21, %c0_22] : memref<10x192xf32, #tpu.memory_space<vmem>>, vector<10x192xf32>
    %cst_23 = arith.constant dense<0.000000e+00> : vector<32x192xf32>
    %48 = tpu.matmul %41, %47, %cst_23 {dimension_numbers = #tpu.dot_dimension_numbers<[1], [0], [0], [1], [0, 0, 1, 1], [], []>} : vector<32x10xf32>, vector<10x192xf32>, vector<32x192xf32> -> vector<32x192xf32>
    %49 = arith.addf %46, %48 : vector<32x192xf32>
    %c0_24 = arith.constant 0 : index
    %c0_25 = arith.constant 0 : index
    %c0_26 = arith.constant 0 : index
    %50 = vector.load %arg8[%c0_24, %c0_25, %c0_26] : memref<1x32x192xf32, #tpu.memory_space<vmem>>, vector<1x32x192xf32>
    %51 = vector.shape_cast %50 : vector<1x32x192xf32> to vector<32x192xf32>
    %52 = vector.shape_cast %49 : vector<32x192xf32> to vector<1x32x192xf32>
    tpu.vector_store %arg8[%c0_24, %c0_25, %c0_26], %52 {strides = array<i32>} : memref<1x32x192xf32, #tpu.memory_space<vmem>>, vector<1x32x192xf32>,
    return
  }
  func.func @transform_0(%arg0: i32, %arg1: i32) -> (i32, i32, i32) {
    %c0_i32 = arith.constant 0 : i32
    %c0_i32_0 = arith.constant 0 : i32
    return %arg0, %arg1, %c0_i32 : i32, i32, i32
  }
  func.func @transform_1(%arg0: i32, %arg1: i32) -> (i32, i32, i32) {
    %c4_i32 = arith.constant 4 : i32
    %0 = arith.muli %arg1, %c4_i32 : i32
    %c1_i32 = arith.constant 1 : i32
    %1 = arith.subi %0, %c1_i32 : i32
    %c0_i32 = arith.constant 0 : i32
    %2 = arith.maxsi %1, %c0_i32 : i32
    %c0_i32_0 = arith.constant 0 : i32
    %c0_i32_1 = arith.constant 0 : i32
    return %arg0, %2, %c0_i32_0 : i32, i32, i32
  }
  func.func @transform_2(%arg0: i32, %arg1: i32) -> (i32, i32, i32) {
    %c1_i32 = arith.constant 1 : i32
    %0 = arith.addi %arg1, %c1_i32 : i32
    %c4_i32 = arith.constant 4 : i32
    %1 = arith.muli %0, %c4_i32 : i32
    %c15_i32 = arith.constant 15 : i32
    %2 = arith.minsi %1, %c15_i32 : i32
    %c0_i32 = arith.constant 0 : i32
    %c0_i32_0 = arith.constant 0 : i32
    return %arg0, %2, %c0_i32 : i32, i32, i32
  }
  func.func @transform_3(%arg0: i32, %arg1: i32) -> (i32, i32) {
    %c0_i32 = arith.constant 0 : i32
    %c0_i32_0 = arith.constant 0 : i32
    %c0_i32_1 = arith.constant 0 : i32
    return %c0_i32, %c0_i32_0 : i32, i32
  }
  func.func @transform_4(%arg0: i32, %arg1: i32) -> (i32, i32) {
    %c0_i32 = arith.constant 0 : i32
    %c0_i32_0 = arith.constant 0 : i32
    %c0_i32_1 = arith.constant 0 : i32
    return %c0_i32, %c0_i32_0 : i32, i32
  }
  func.func @transform_5(%arg0: i32, %arg1: i32) -> (i32, i32) {
    %c0_i32 = arith.constant 0 : i32
    %c0_i32_0 = arith.constant 0 : i32
    %c0_i32_1 = arith.constant 0 : i32
    return %c0_i32, %c0_i32_0 : i32, i32
  }
  func.func @transform_6(%arg0: i32, %arg1: i32) -> (i32, i32, i32) {
    %c0_i32 = arith.constant 0 : i32
    %c0_i32_0 = arith.constant 0 : i32
    return %arg0, %arg1, %c0_i32 : i32, i32, i32
  }
}

</mosaic_0001>

<llo_original>
// kernel: tpu_custom_call.1
$region0: #{tpu_custom_call.1}
  #allocation0 [shape = 'u32[]', space=smem, size = 0x4, offset = 0x4, fixed_abs, tag = 'smem constant byte address 0x4 - core index']
  #allocation1 [shape = 'u32[144,128]{1,0:T(1,128)}', space=vmem, size = 0x12000, scoped, tag = 'internal scratch']
  %s0 = inlined_call_operand.vmem [shape: f32[2,128,128], index: 0, kind: input, shape index: {}]
  %s1 = inlined_call_operand.hbm [shape: f32[2,128,128], index: 1, kind: input, shape index: {}]
  %s2 = inlined_call_operand.hbm [shape: f32[2,128,128], index: 2, kind: input, shape index: {}]
  %s3 = inlined_call_operand.vmem [shape: f32[10,192], index: 3, kind: input, shape index: {}]
  %s4 = inlined_call_operand.vmem [shape: f32[128,192], index: 4, kind: input, shape index: {}]
  %s5 = inlined_call_operand.vmem [shape: f32[10,192], index: 5, kind: input, shape index: {}]
  %s6 = inlined_call_operand.vmem [shape: f32[2,128,192], index: 6, kind: output, shape index: {}]
  %s7 = sld [smem:[#allocation0]]
  $region65: #{tpu_custom_call.1} parent=0
    _
  %s9 = ssub.s32 1, %s7
  %s10 = scalar_select 0, %s9, %s7
  $region1: #{tpu_custom_call.1} parent=0
    #allocation2 [shape = 'u8[8192]{0}', space=vmem, size = 0x2000, scoped, tag = 'input window, operand 1']
    #allocation3 [shape = 's32[2]{0}', space=sflag, size = 0x8, scoped, tag = 'scoped memory for tpu_custom_call.1']
    #allocation4 [shape = 'u8[8192]{0}', space=vmem, size = 0x2000, scoped, tag = 'input window, operand 2']
    #allocation5 [shape = 's32[2]{0}', space=sflag, size = 0x8, scoped, tag = 'scoped memory for tpu_custom_call.1']
    %11 = vsyncpa [#allocation3], 0
    %s12 = scalar_lea.sflag [#allocation3], 1
    %13 = vsyncpa %s12, 0
    %14 = vsyncpa [#allocation5], 0
    %s15 = scalar_lea.sflag [#allocation5], 1
    %16 = vsyncpa %s15, 0
    loop: start=0, step=1, limit=10
    $region2: #{tpu_custom_call.1} parent=1 // loop_pre_header
      _
    $region3: #{tpu_custom_call.1} parent=1 // loop_header
      %s18 = sphi 0, %s22
      %p19 = scmp.ge.s32.totalorder %s18, 10
      %s25 = sphi 0, %s37
      %s26 = sphi 0, %s33
      %s27 = sphi 0, %s25
      %s28 = sphi 0, %s26
      %s29 = sphi 0, %s27
      %s30 = sphi 0, %s28
      %s42 = sphi 0, %s44
      %s45 = sphi 0, %s42
      %s46 = sphi 0, %s45
      %s62 = sphi 0, %s46
      %s78 = sphi 0, %s80
      %s81 = sphi 0, %s78
      %s82 = sphi 0, %s81
      %s98 = sphi 0, %s82
      %s114 = sphi 0, %s116
      %s117 = sphi 0, %s114
      %s118 = sphi 0, %s117
      %s134 = sphi 0, %s118
      %s138 = sphi 0, %s138
      %s140 = sphi 0, %s138
      %s141 = sphi 0, %s140
      %s155 = sphi 0, %s141
      %s159 = sphi 0, %s159
      %s161 = sphi 0, %s159
      %s162 = sphi 0, %s161
      %s176 = sphi 0, %s162
      %s180 = sphi 0, %s180
      %s182 = sphi 0, %s180
      %s183 = sphi 0, %s182
      %s197 = sphi 0, %s183
      %s205 = sphi 0, %s207
      %s208 = sphi 0, %s205
      %s209 = sphi 0, %s208
      %s225 = sphi 0, %s209
    $region4: #{tpu_custom_call.1} parent=1 // loop_header_branch
      %21 = sbr.rel (%p19) target = $region8
    $region5: #{tpu_custom_call.1} parent=1 // loop_body
      %s23 = ssub.s32 %s18, 1
      %s24 = ssub.s32 %s18, 2
      %s31 = sadd.s32 1, %s26
      %p32 = scmp.ge.s32.totalorder %s31, 4
      %s33 = scalar_select %p32, 0, %s31
      %s34 = sadd.s32 1, %s25
      %s35 = scalar_select %p32, %s34, %s25
      %p36 = scmp.ge.s32.totalorder %s35, 2
      %s37 = scalar_select %p36, 0, %s35
      %s38 = ssub.s32 %s25, %s37
      %s39 = ssub.s32 %s26, %s33
      %s40 = sor.u32 %s38, %s39
      %p41 = scmp.eq.s32.totalorder %s40, 0
      %s43 = sadd.s32 %s42, 1
      %s44 = scalar_select %p41, %s42, %s43
      %p47 = pneg %p41
      %p48 = scmp.eq.s32.totalorder %s18, 7
      %p49 = por %p47, %p48
      %p50 = scmp.ne.s32.totalorder %s42, %s45
      %p51 = scmp.eq.s32.totalorder %s18, 0
      %p52 = por %p50, %p51
      %p53 = scmp.ne.s32.totalorder %s42, %s45
      %p54 = scmp.eq.s32.totalorder %s23, 7
      %p55 = por %p53, %p54
      %p56 = scmp.ne.s32.totalorder %s45, %s46
      %p57 = scmp.eq.s32.totalorder %s23, 0
      %p58 = por %p56, %p57
      %p59 = scmp.ne.s32.totalorder %s45, %s46
      %p60 = scmp.eq.s32.totalorder %s24, 7
      %p61 = por %p59, %p60
      %p63 = scmp.ne.s32.totalorder %s46, %s62
      %p64 = scmp.eq.s32.totalorder %s24, 0
      %p65 = por %p63, %p64
      %s66 = smul.u32 %s26, 4
      %s67 = ssub.s32 %s66, 1
      %p68 = scmp.gt.s32.totalorder %s67, 0
      %s69 = scalar_select %p68, %s67, 0
      %s70 = smul.u32 %s33, 4
      %s71 = ssub.s32 %s70, 1
      %p72 = scmp.gt.s32.totalorder %s71, 0
      %s73 = scalar_select %p72, %s71, 0
      %s74 = ssub.s32 %s25, %s37
      %s75 = ssub.s32 %s69, %s73
      %s76 = sor.u32 %s74, %s75
      %p77 = scmp.eq.s32.totalorder %s76, 0
      %s79 = sadd.s32 %s78, 1
      %s80 = scalar_select %p77, %s78, %s79
      %p83 = pneg %p77
      %p84 = scmp.eq.s32.totalorder %s18, 7
      %p85 = por %p83, %p84
      %p86 = scmp.ne.s32.totalorder %s78, %s81
      %p87 = scmp.eq.s32.totalorder %s18, 0
      %p88 = por %p86, %p87
      %p89 = scmp.ne.s32.totalorder %s78, %s81
      %p90 = scmp.eq.s32.totalorder %s23, 7
      %p91 = por %p89, %p90
      %p92 = scmp.ne.s32.totalorder %s81, %s82
      %p93 = scmp.eq.s32.totalorder %s23, 0
      %p94 = por %p92, %p93
      %p95 = scmp.ne.s32.totalorder %s81, %s82
      %p96 = scmp.eq.s32.totalorder %s24, 7
      %p97 = por %p95, %p96
      %p99 = scmp.ne.s32.totalorder %s82, %s98
      %p100 = scmp.eq.s32.totalorder %s24, 0
      %p101 = por %p99, %p100
      %s102 = sadd.s32 %s26, 1
      %s103 = smul.u32 %s102, 4
      %p104 = scmp.lt.s32.totalorder %s103, 15
      %s105 = scalar_select %p104, %s103, 15
      %s106 = sadd.s32 %s33, 1
      %s107 = smul.u32 %s106, 4
      %p108 = scmp.lt.s32.totalorder %s107, 15
      %s109 = scalar_select %p108, %s107, 15
      %s110 = ssub.s32 %s25, %s37
      %s111 = ssub.s32 %s105, %s109
      %s112 = sor.u32 %s110, %s111
      %p113 = scmp.eq.s32.totalorder %s112, 0
      %s115 = sadd.s32 %s114, 1
      %s116 = scalar_select %p113, %s114, %s115
      %p119 = pneg %p113
      %p120 = scmp.eq.s32.totalorder %s18, 7
      %p121 = por %p119, %p120
      %p122 = scmp.ne.s32.totalorder %s114, %s117
      %p123 = scmp.eq.s32.totalorder %s18, 0
      %p124 = por %p122, %p123
      %p125 = scmp.ne.s32.totalorder %s114, %s117
      %p126 = scmp.eq.s32.totalorder %s23, 7
      %p127 = por %p125, %p126
      %p128 = scmp.ne.s32.totalorder %s117, %s118
      %p129 = scmp.eq.s32.totalorder %s23, 0
      %p130 = por %p128, %p129
      %p131 = scmp.ne.s32.totalorder %s117, %s118
      %p132 = scmp.eq.s32.totalorder %s24, 7
      %p133 = por %p131, %p132
      %p135 = scmp.ne.s32.totalorder %s118, %s134
      %p136 = scmp.eq.s32.totalorder %s24, 0
      %p137 = por %p135, %p136
      %s139 = sadd.s32 %s138, 1
      %p142 = scmp.eq.s32.totalorder %s18, 7
      %p143 = scmp.ne.s32.totalorder %s138, %s140
      %p144 = scmp.eq.s32.totalorder %s18, 0
      %p145 = por %p143, %p144
      %p146 = scmp.ne.s32.totalorder %s138, %s140
      %p147 = scmp.eq.s32.totalorder %s23, 7
      %p148 = por %p146, %p147
      %p149 = scmp.ne.s32.totalorder %s140, %s141
      %p150 = scmp.eq.s32.totalorder %s23, 0
      %p151 = por %p149, %p150
      %p152 = scmp.ne.s32.totalorder %s140, %s141
      %p153 = scmp.eq.s32.totalorder %s24, 7
      %p154 = por %p152, %p153
      %p156 = scmp.ne.s32.totalorder %s141, %s155
      %p157 = scmp.eq.s32.totalorder %s24, 0
      %p158 = por %p156, %p157
      %s160 = sadd.s32 %s159, 1
      %p163 = scmp.eq.s32.totalorder %s18, 7
      %p164 = scmp.ne.s32.totalorder %s159, %s161
      %p165 = scmp.eq.s32.totalorder %s18, 0
      %p166 = por %p164, %p165
      %p167 = scmp.ne.s32.totalorder %s159, %s161
      %p168 = scmp.eq.s32.totalorder %s23, 7
      %p169 = por %p167, %p168
      %p170 = scmp.ne.s32.totalorder %s161, %s162
      %p171 = scmp.eq.s32.totalorder %s23, 0
      %p172 = por %p170, %p171
      %p173 = scmp.ne.s32.totalorder %s161, %s162
      %p174 = scmp.eq.s32.totalorder %s24, 7
      %p175 = por %p173, %p174
      %p177 = scmp.ne.s32.totalorder %s162, %s176
      %p178 = scmp.eq.s32.totalorder %s24, 0
      %p179 = por %p177, %p178
      %s181 = sadd.s32 %s180, 1
      %p184 = scmp.eq.s32.totalorder %s18, 7
      %p185 = scmp.ne.s32.totalorder %s180, %s182
      %p186 = scmp.eq.s32.totalorder %s18, 0
      %p187 = por %p185, %p186
      %p188 = scmp.ne.s32.totalorder %s180, %s182
      %p189 = scmp.eq.s32.totalorder %s23, 7
      %p190 = por %p188, %p189
      %p191 = scmp.ne.s32.totalorder %s182, %s183
      %p192 = scmp.eq.s32.totalorder %s23, 0
      %p193 = por %p191, %p192
      %p194 = scmp.ne.s32.totalorder %s182, %s183
      %p195 = scmp.eq.s32.totalorder %s24, 7
      %p196 = por %p194, %p195
      %p198 = scmp.ne.s32.totalorder %s183, %s197
      %p199 = scmp.eq.s32.totalorder %s24, 0
      %p200 = por %p198, %p199
      %s201 = ssub.s32 %s25, %s37
      %s202 = ssub.s32 %s26, %s33
      %s203 = sor.u32 %s201, %s202
      %p204 = scmp.eq.s32.totalorder %s203, 0
      %s206 = sadd.s32 %s205, 1
      %s207 = scalar_select %p204, %s205, %s206
      %p210 = pneg %p204
      %p211 = scmp.eq.s32.totalorder %s18, 7
      %p212 = por %p210, %p211
      %p213 = scmp.ne.s32.totalorder %s205, %s208
      %p214 = scmp.eq.s32.totalorder %s18, 0
      %p215 = por %p213, %p214
      %p216 = scmp.ne.s32.totalorder %s205, %s208
      %p217 = scmp.eq.s32.totalorder %s23, 7
      %p218 = por %p216, %p217
      %p219 = scmp.ne.s32.totalorder %s208, %s209
      %p220 = scmp.eq.s32.totalorder %s23, 0
      %p221 = por %p219, %p220
      %p222 = scmp.ne.s32.totalorder %s208, %s209
      %p223 = scmp.eq.s32.totalorder %s24, 7
      %p224 = por %p222, %p223
      %p226 = scmp.ne.s32.totalorder %s209, %s225
      %p227 = scmp.eq.s32.totalorder %s24, 0
      %p228 = por %p226, %p227
      %p229 = scmp.le.s32.totalorder 1, %s18
      %p230 = scmp.lt.s32.totalorder %s18, 9
      %p231 = pnand %p229, %p230
      %p232 = pneg %p231
      // Predicated region
      $region9: #{tpu_custom_call.1} parent=5 // pred_check
        _
      $region10: #{tpu_custom_call.1} parent=5 // pred_check_branch
        %234 = sbr.rel (%p231) target = $region12
      $region11: #{tpu_custom_call.1} parent=5 // pred_region
        %s235 = ssub.s32 %s18, 1
        // Predicated region
        $region13: #{tpu_custom_call.1} parent=11 // pred_check
          %p236 = pneg %p151
        $region14: #{tpu_custom_call.1} parent=11 // pred_check_branch
          %238 = sbr.rel (%p236) target = $region16
        $region15: #{tpu_custom_call.1} parent=11 // pred_region
          _
        $region16: #{tpu_custom_call.1} parent=11 // pred_fallthru
          _
        // Predicated region
        $region17: #{tpu_custom_call.1} parent=11 // pred_check
          %p239 = pneg %p172
        $region18: #{tpu_custom_call.1} parent=11 // pred_check_branch
          %241 = sbr.rel (%p239) target = $region20
        $region19: #{tpu_custom_call.1} parent=11 // pred_region
          _
        $region20: #{tpu_custom_call.1} parent=11 // pred_fallthru
          _
        // Predicated region
        $region21: #{tpu_custom_call.1} parent=11 // pred_check
          %p242 = pneg %p193
        $region22: #{tpu_custom_call.1} parent=11 // pred_check_branch
          %244 = sbr.rel (%p242) target = $region24
        $region23: #{tpu_custom_call.1} parent=11 // pred_region
          _
        $region24: #{tpu_custom_call.1} parent=11 // pred_fallthru
          _
      $region12: #{tpu_custom_call.1} parent=5 // pred_fallthru
        _
      %p245 = scmp.lt.s32.totalorder %s18, 8
      // Predicated region
      $region25: #{tpu_custom_call.1} parent=5 // pred_check
        %p246 = pneg %p245
      $region26: #{tpu_custom_call.1} parent=5 // pred_check_branch
        %248 = sbr.rel (%p246) target = $region28
      $region27: #{tpu_custom_call.1} parent=5 // pred_region
        // Predicated region
        $region29: #{tpu_custom_call.1} parent=27 // pred_check
          %p249 = pneg %p52
        $region30: #{tpu_custom_call.1} parent=27 // pred_check_branch
          %251 = sbr.rel (%p249) target = $region32
        $region31: #{tpu_custom_call.1} parent=27 // pred_region
          %s252 = smul.u32 4, %s26
          %p253 = scmp.lt.s32.totalorder %s25, 1
          %s254 = scalar_select %p253, %s25, 1
          %p255 = scmp.lt.s32.totalorder %s252, 15
          %s256 = scalar_select %p255, %s252, 15
          %s257 = smul.addr %s254, 16
          %s258 = sadd.s32 %s256, %s257
          %s259 = smul.addr %s258, 8
          %s260 = scalar_lea.vmem %s0, %s259
          %s261 = smul.u32 4, %s26
        $region32: #{tpu_custom_call.1} parent=27 // pred_fallthru
          _
        // Predicated region
        $region33: #{tpu_custom_call.1} parent=27 // pred_check
          %p262 = pneg %p88
        $region34: #{tpu_custom_call.1} parent=27 // pred_check_branch
          %264 = sbr.rel (%p262) target = $region36
        $region35: #{tpu_custom_call.1} parent=27 // pred_region
          %s265 = sand.u32 %s78, 1
          %s266 = scalar_lea.sflag [#allocation3], %s265
          %s267 = sand.u32 %s78, 1
          %s268 = smul.addr %s267, 8
          %s269 = scalar_lea.vmem [#allocation2], %s268
          %s270 = smul.u32 %s26, 4
          %s271 = ssub.s32 %s270, 1
          %p272 = scmp.gt.s32.totalorder %s271, 0
          %s273 = scalar_select %p272, %s271, 0
          %s275 = ssub.s32 128, 128
          %276 = vsyncadd %s266, %s275
          %s277 = smul.addr %s25, 16
          %s278 = sadd.s32 %s273, %s277
          %s279 = smul.addr %s278, 128
          %s280 = scalar_lea.hbm %s1, %s279
          %s282 = sshll.u32 %s269, 4
          %s283 = int_to_ptr.vmem [resolvable:$true] %s282
          %285 = dma.hbm_to_vmem [thread:$0]  %s280, 128, %s283, %s266
        $region36: #{tpu_custom_call.1} parent=27 // pred_fallthru
          _
        // Predicated region
        $region37: #{tpu_custom_call.1} parent=27 // pred_check
          %p286 = pneg %p124
        $region38: #{tpu_custom_call.1} parent=27 // pred_check_branch
          %288 = sbr.rel (%p286) target = $region40
        $region39: #{tpu_custom_call.1} parent=27 // pred_region
          %s289 = sand.u32 %s114, 1
          %s290 = scalar_lea.sflag [#allocation5], %s289
          %s291 = sand.u32 %s114, 1
          %s292 = smul.addr %s291, 8
          %s293 = scalar_lea.vmem [#allocation4], %s292
          %s294 = sadd.s32 %s26, 1
          %s295 = smul.u32 %s294, 4
          %p296 = scmp.lt.s32.totalorder %s295, 15
          %s297 = scalar_select %p296, %s295, 15
          %s299 = ssub.s32 128, 128
          %300 = vsyncadd %s290, %s299
          %s301 = smul.addr %s25, 16
          %s302 = sadd.s32 %s297, %s301
          %s303 = smul.addr %s302, 128
          %s304 = scalar_lea.hbm %s2, %s303
          %s306 = sshll.u32 %s293, 4
          %s307 = int_to_ptr.vmem [resolvable:$true] %s306
          %309 = dma.hbm_to_vmem [thread:$0]  %s304, 128, %s307, %s290
        $region40: #{tpu_custom_call.1} parent=27 // pred_fallthru
          _
      $region28: #{tpu_custom_call.1} parent=5 // pred_fallthru
        _
      %p310 = scmp.le.s32.totalorder 1, %s18
      %p311 = scmp.lt.s32.totalorder %s18, 9
      %p312 = pnand %p310, %p311
      %p313 = pneg %p312
      // Predicated region
      $region41: #{tpu_custom_call.1} parent=5 // pred_check
        _
      $region42: #{tpu_custom_call.1} parent=5 // pred_check_branch
        %315 = sbr.rel (%p312) target = $region44
      $region43: #{tpu_custom_call.1} parent=5 // pred_region
        %s316 = ssub.s32 %s18, 1
        %s317 = sand.u32 %s81, 1
        %s318 = scalar_lea.sflag [#allocation3], %s317
        %s319 = sand.u32 %s81, 1
        %s320 = smul.addr %s319, 8
        %s321 = scalar_lea.vmem [#allocation2], %s320
        // Predicated region
        $region45: #{tpu_custom_call.1} parent=43 // pred_check
          %p322 = pneg %p94
        $region46: #{tpu_custom_call.1} parent=43 // pred_check_branch
          %324 = sbr.rel (%p322) target = $region48
        $region47: #{tpu_custom_call.1} parent=43 // pred_region
          %325 = dma.done %s318, 128
        $region48: #{tpu_custom_call.1} parent=43 // pred_fallthru
          _
        %s326 = sand.u32 %s117, 1
        %s327 = scalar_lea.sflag [#allocation5], %s326
        %s328 = sand.u32 %s117, 1
        %s329 = smul.addr %s328, 8
        %s330 = scalar_lea.vmem [#allocation4], %s329
        // Predicated region
        $region49: #{tpu_custom_call.1} parent=43 // pred_check
          %p331 = pneg %p130
        $region50: #{tpu_custom_call.1} parent=43 // pred_check_branch
          %333 = sbr.rel (%p331) target = $region52
        $region51: #{tpu_custom_call.1} parent=43 // pred_region
          %334 = dma.done %s327, 128
        $region52: #{tpu_custom_call.1} parent=43 // pred_fallthru
          _
        %s335 = smul.u32 4, %s28
        %p336 = scmp.lt.s32.totalorder %s27, 1
        %s337 = scalar_select %p336, %s27, 1
        %p338 = scmp.lt.s32.totalorder %s335, 15
        %s339 = scalar_select %p338, %s335, 15
        %s340 = smul.addr %s337, 16
        %s341 = sadd.s32 %s339, %s340
        %s342 = smul.addr %s341, 8
        %s343 = scalar_lea.vmem %s0, %s342
        %p344 = pneg %p58
        %p345 = pneg %p55
        %s346 = sand.u32 %s81, 1
        %s347 = scalar_lea.sflag [#allocation3], %s346
        %s348 = sand.u32 %s81, 1
        %s349 = smul.addr %s348, 8
        %s350 = scalar_lea.vmem [#allocation2], %s349
        %p351 = pneg %p94
        %p352 = pneg %p91
        %s353 = sand.u32 %s117, 1
        %s354 = scalar_lea.sflag [#allocation5], %s353
        %s355 = sand.u32 %s117, 1
        %s356 = smul.addr %s355, 8
        %s357 = scalar_lea.vmem [#allocation4], %s356
        %p358 = pneg %p130
        %p359 = pneg %p127
        %p360 = pneg %p151
        %p361 = pneg %p148
        %p362 = pneg %p172
        %p363 = pneg %p169
        %p364 = pneg %p193
        %p365 = pneg %p190
        %p366 = pneg %p221
        %p367 = pneg %p218
        %s368 = smul.u32 4, %s28
        %p369 = scmp.lt.s32.totalorder %s27, 1
        %s370 = scalar_select %p369, %s27, 1
        %p371 = scmp.lt.s32.totalorder %s368, 15
        %s372 = scalar_select %p371, %s368, 15
        %s373 = smul.addr %s372, 2
        %s374 = smul.addr %s370, 32
        %s375 = sadd.s32 %s373, %s374
        %s376 = smul.addr %s375, 8
        %s377 = scalar_lea.vmem %s6, %s376
        %s378 = smul.u32 4, %s28
        %p379 = scmp.lt.s32.totalorder %s27, 1
        %s380 = scalar_select %p379, %s27, 1
        %p381 = scmp.lt.s32.totalorder %s378, 15
        %s382 = scalar_select %p381, %s378, 15
        %s383 = smul.addr %s380, 16
        %s384 = sadd.s32 %s382, %s383
        %s385 = smul.addr %s384, 8
        %s386 = scalar_lea.vmem %s0, %s385
        %s387 = smul.u32 4, %s28
        %s388 = smul.u32 %s28, 4
        %s389 = ssub.s32 %s388, 1
        %p390 = scmp.gt.s32.totalorder %s389, 0
        %s391 = scalar_select %p390, %s389, 0
        %s392 = sadd.s32 %s28, 1
        %s393 = smul.u32 %s392, 4
        %p394 = scmp.lt.s32.totalorder %s393, 15
        %s395 = scalar_select %p394, %s393, 15
        %s396 = smul.u32 4, %s28
        %p397 = scmp.lt.s32.totalorder %s27, 1
        %s398 = scalar_select %p397, %s27, 1
        %p399 = scmp.lt.s32.totalorder %s396, 15
        %s400 = scalar_select %p399, %s396, 15
        %s401 = smul.addr %s400, 2
        %s402 = smul.addr %s398, 32
        %s403 = sadd.s32 %s401, %s402
        %s404 = smul.addr %s403, 8
        %s405 = scalar_lea.vmem %s6, %s404
        %s406 = smul.u32 4, %s28
        %s407 = smul.u32 %s28, 32
        %v408 = vld [vmem:[%s386] sm:$0xff]
        %v409 = vld [vmem:[%s386 + $0x8] sm:$0xff]
        %v410 = vld [vmem:[%s386 + $0x10] sm:$0xff]
        %v411 = vld [vmem:[%s386 + $0x18] sm:$0xff]
        %v412 = vld [vmem:[%s321 + $0x7] sm:$0x1]
        %v413 = vld [vmem:[%s330] sm:$0x1]
        %v414 = vlaneseq
        %v415 = vshrl.u32 %v414, 7
        %v416 = vadd.s32 %v415, 8
        %v417 = vadd.s32 %v415, 16
        %v418 = vadd.s32 %v415, 24
        %v419 = vstv %s407
        %v420 = vadd.s32 %v415, %v419
        %v421 = vadd.s32 %v416, %v419
        %v422 = vadd.s32 %v417, %v419
        %v423 = vadd.s32 %v418, %v419
        %v424 = vlaneseq
        %v425 = vand.u32 %v424, 127
        %vm426 = vcmp.lt.s32.totalorder %v420, 128
        %vm427 = vcmp.lt.s32.totalorder %v421, 128
        %vm428 = vcmp.lt.s32.totalorder %v422, 128
        %vm429 = vcmp.lt.s32.totalorder %v423, 128
        %vm430 = vcmp.eq.s32.totalorder %v420, 128
        %vm431 = vcmp.eq.s32.totalorder %v421, 128
        %vm432 = vcmp.eq.s32.totalorder %v422, 128
        %vm433 = vcmp.eq.s32.totalorder %v423, 128
        %vm434 = vcmp.lt.s32.totalorder %v425, 0
        %vm435 = vmand %vm430, %vm434
        %vm436 = vmand %vm431, %vm434
        %vm437 = vmand %vm432, %vm434
        %vm438 = vmand %vm433, %vm434
        %vm439 = vmor %vm426, %vm435
        %vm440 = vmor %vm427, %vm436
        %vm441 = vmor %vm428, %vm437
        %vm442 = vmor %vm429, %vm438
        %v443 = vsel %vm439, %v408, 0.0
        %v444 = vsel %vm440, %v409, 0.0
        %v445 = vsel %vm441, %v410, 0.0
        %v446 = vsel %vm442, %v411, 0.0
        %s447 = sadd.s32 %s407, 32
        %p448 = scmp.lt.s32.totalorder %s447, 128
        %p449 = scmp.eq.s32.totalorder %s447, 128
        %s450 = scalar_select %p449, 1, 0
        %v451 = vstv %s450
        %vm452 = vcmp.eq.s32.totalorder %v451, 1
        %vm453 = vmand %vm452, %vm434
        %s454 = scalar_select %p448, 1, 0
        %v455 = vstv %s454
        %vm456 = vcmp.eq.s32.totalorder %v455, 1
        %vm457 = vmor %vm456, %vm453
        %v458 = vsel %vm457, %v413, 0.0
        %p459 = scmp.gt.s32.totalorder %s28, 0
        %s460 = scalar_select %p459, 1, 0
        %v461 = vstv %s460
        %vm462 = vcmp.eq.s32.totalorder %v461, 1
        %v463 = vsel %vm462, %v412, 0.0
        %vm468 = vcmask 1040384
        %v469 = vrot.slane %v443, 7
        %v470 = vrot.slane %v444, 7
        %v471 = vsel %vm468, %v469, %v470
        %v472 = vrot.slane %v445, 7
        %v473 = vsel %vm468, %v470, %v472
        %v474 = vrot.slane %v446, 7
        %v475 = vsel %vm468, %v472, %v474
        %v477 = vsel %vm468, %v463, %v469
        %vm478 = vcmask 1046528
        %v479 = vrot.slane %v443, 1
        %v480 = vrot.slane %v444, 1
        %v481 = vsel %vm478, %v479, %v480
        %v482 = vrot.slane %v445, 1
        %v483 = vsel %vm478, %v480, %v482
        %v484 = vrot.slane %v446, 1
        %v485 = vsel %vm478, %v482, %v484
        %v488 = vrot.slane %v458, 1
        %v490 = vsel %vm478, %v484, %v488
        %v491 = vld [vmem:[%s4] sm:$0xff]
        %v492 = vld [vmem:[%s4 + $0x8] sm:$0xff]
        %v493 = vld [vmem:[%s4 + $0x10] sm:$0xff]
        %v494 = vld [vmem:[%s4 + $0x18] sm:$0xff]
        %v495 = vld [vmem:[%s4 + $0x20] sm:$0xff]
        %v496 = vld [vmem:[%s4 + $0x28] sm:$0xff]
        %v497 = vld [vmem:[%s4 + $0x30] sm:$0xff]
        %v498 = vld [vmem:[%s4 + $0x38] sm:$0xff]
        %v499 = vld [vmem:[%s4 + $0x40] sm:$0xff]
        %v500 = vld [vmem:[%s4 + $0x48] sm:$0xff]
        %v501 = vld [vmem:[%s4 + $0x50] sm:$0xff]
        %v502 = vld [vmem:[%s4 + $0x58] sm:$0xff]
        %v503 = vld [vmem:[%s4 + $0x60] sm:$0xff]
        %v504 = vld [vmem:[%s4 + $0x68] sm:$0xff]
        %v505 = vld [vmem:[%s4 + $0x70] sm:$0xff]
        %v506 = vld [vmem:[%s4 + $0x78] sm:$0xff]
        %v507 = vld [vmem:[%s4 + $0x80] sm:$0xff]
        %v508 = vld [vmem:[%s4 + $0x88] sm:$0xff]
        %v509 = vld [vmem:[%s4 + $0x90] sm:$0xff]
        %v510 = vld [vmem:[%s4 + $0x98] sm:$0xff]
        %v511 = vld [vmem:[%s4 + $0xa0] sm:$0xff]
        %v512 = vld [vmem:[%s4 + $0xa8] sm:$0xff]
        %v513 = vld [vmem:[%s4 + $0xb0] sm:$0xff]
        %v514 = vld [vmem:[%s4 + $0xb8] sm:$0xff]
        %v515 = vld [vmem:[%s4 + $0xc0] sm:$0xff]
        %v516 = vld [vmem:[%s4 + $0xc8] sm:$0xff]
        %v517 = vld [vmem:[%s4 + $0xd0] sm:$0xff]
        %v518 = vld [vmem:[%s4 + $0xd8] sm:$0xff]
        %v519 = vld [vmem:[%s4 + $0xe0] sm:$0xff]
        %v520 = vld [vmem:[%s4 + $0xe8] sm:$0xff]
        %v521 = vld [vmem:[%s4 + $0xf0] sm:$0xff]
        %v522 = vld [vmem:[%s4 + $0xf8] sm:$0xff]
        %v523 = vld [vmem:[%s3] sm:$0xff]
        %v524 = vld [vmem:[%s3 + $0x8] sm:$0xff]
        %v525 = vld [vmem:[%s3 + $0x10] sm:$0x3]
        %v526 = vld [vmem:[%s3 + $0x18] sm:$0x3]
        %528 = vrot.lane.b32.xlu0 %v477, 10
        %v529 = vpop.permute.xlu0 %528
        %530 = vrot.lane.b32.xlu0 %v471, 10
        %v531 = vpop.permute.xlu0 %530
        %532 = vrot.lane.b32.xlu0 %v473, 10
        %v533 = vpop.permute.xlu0 %532
        %534 = vrot.lane.b32.xlu0 %v475, 10
        %v535 = vpop.permute.xlu0 %534
        %vm536 = vcmask 80896
        %v537 = vsel %vm536, %v529, 0
        %v539 = vsel %vm536, %v531, 0
        %v541 = vsel %vm536, %v533, 0
        %v543 = vsel %vm536, %v535, 0
        %vm545 = vcmask 1041408
        %v547 = vsel %vm545, %v525, 0
        %v550 = vsel %vm545, %v526, 0
        %552 = vmatprep.subr.mxu0 0.0
        %553 = vmatpush1.msra.mxu0 0.0
        %554 = vmatprep.subr.mxu0 0.0
        %555 = vmatpush1.msra.mxu0 0.0
        %556 = vmatprep.subr.mxu0 0.0
        %557 = vmatpush1.msra.mxu0 0.0
        %558 = vmatprep.subr.mxu0 0.0
        %559 = vmatpush1.msra.mxu0 0.0
        %560 = vmatprep.subr.mxu0 0.0
        %561 = vmatpush1.msra.mxu0 0.0
        %562 = vmatprep.subr.mxu0 0.0
        %563 = vmatpush1.msra.mxu0 0.0
        %564 = vmatprep.subr.mxu0 0.0
        %565 = vmatpush1.msra.mxu0 0.0
        %566 = vmatprep.subr.mxu0 0.0
        %567 = vmatpush1.msra.mxu0 0.0
        %568 = vmatprep.subr.mxu0 0.0
        %569 = vmatpush1.msra.mxu0 0.0
        %570 = vmatprep.subr.mxu0 0.0
        %571 = vmatpush1.msra.mxu0 0.0
        %572 = vmatprep.subr.mxu0 0.0
        %573 = vmatpush1.msra.mxu0 0.0
        %574 = vmatprep.subr.mxu0 0.0
        %575 = vmatpush1.msra.mxu0 0.0
        %576 = vmatprep.subr.mxu0 0.0
        %577 = vmatpush1.msra.mxu0 0.0
        %578 = vmatprep.subr.mxu0 0.0
        %579 = vmatpush1.msra.mxu0 0.0
        %580 = vmatprep.subr.mxu0 %v550
        %581 = vmatpush1.msra.mxu0 %v547
        %582 = vmatprep.subr.mxu0 %v524
        %583 = vmatpush1.msra.mxu0 %v523
        %584 = vmatprep.subr.mxu0 0.0
        %585 = vmatpush2.msra.mxu0 0.0
        %586 = vmatprep.subr.mxu0 0.0
        %587 = vmatpush2.msra.mxu0 0.0
        %588 = vmatprep.subr.mxu0 0.0
        %589 = vmatpush2.msra.mxu0 0.0
        %590 = vmatprep.subr.mxu0 0.0
        %591 = vmatpush2.msra.mxu0 0.0
        %592 = vmatprep.subr.mxu0 0.0
        %593 = vmatpush2.msra.mxu0 0.0
        %594 = vmatprep.subr.mxu0 0.0
        %595 = vmatpush2.msra.mxu0 0.0
        %596 = vmatprep.subr.mxu0 0.0
        %597 = vmatpush2.msra.mxu0 0.0
        %598 = vmatprep.subr.mxu0 0.0
        %599 = vmatpush2.msra.mxu0 0.0
        %600 = vmatprep.subr.mxu0 0.0
        %601 = vmatpush2.msra.mxu0 0.0
        %602 = vmatprep.subr.mxu0 0.0
        %603 = vmatpush2.msra.mxu0 0.0
        %604 = vmatprep.subr.mxu0 0.0
        %605 = vmatpush2.msra.mxu0 0.0
        %606 = vmatprep.subr.mxu0 0.0
        %607 = vmatpush2.msra.mxu0 0.0
        %608 = vmatprep.subr.mxu0 0.0
        %609 = vmatpush2.msra.mxu0 0.0
        %610 = vmatprep.subr.mxu0 0.0
        %611 = vmatpush2.msra.mxu0 0.0
        %612 = vmatprep.subr.mxu0 0.0
        %613 = vmatpush2.msra.mxu0 0.0
        %614 = vmatprep.subr.mxu0 0.0
        %615 = vmatpush2.msra.mxu0 0.0
        %616 = vmatprep.mubr.f32.mxu0 0.0
        %617 = vmatmul.mubr.f32.gmra.mxu0 %v537
        %v618 = vpop.f32.mrf.mxu0
        %v619 = vadd.f32 0.0, %v618
        %v620 = vpop.f32.mrf.mxu0
        %v621 = vadd.f32 0.0, %v620
        %622 = vmatprep.mubr.f32.mxu0 0.0
        %623 = vmatmul.mubr.f32.gmra.mxu0 %v539
        %v624 = vpop.f32.mrf.mxu0
        %v625 = vadd.f32 0.0, %v624
        %v626 = vpop.f32.mrf.mxu0
        %v627 = vadd.f32 0.0, %v626
        %628 = vmatprep.mubr.f32.mxu0 0.0
        %629 = vmatmul.mubr.f32.gmra.mxu0 %v541
        %v630 = vpop.f32.mrf.mxu0
        %v631 = vadd.f32 0.0, %v630
        %v632 = vpop.f32.mrf.mxu0
        %v633 = vadd.f32 0.0, %v632
        %634 = vmatprep.mubr.f32.mxu0 0.0
        %635 = vmatmul.mubr.f32.gmra.mxu0 %v543
        %v636 = vpop.f32.mrf.mxu0
        %v637 = vadd.f32 0.0, %v636
        %v638 = vpop.f32.mrf.mxu0
        %v639 = vadd.f32 0.0, %v638
        %640 = vdwg.mxu0
        %641 = vmatprep.subr.mxu0 %v522
        %642 = vmatpush1.msra.mxu0 %v521
        %643 = vmatprep.subr.mxu0 %v520
        %644 = vmatpush1.msra.mxu0 %v519
        %645 = vmatprep.subr.mxu0 %v518
        %646 = vmatpush1.msra.mxu0 %v517
        %647 = vmatprep.subr.mxu0 %v516
        %648 = vmatpush1.msra.mxu0 %v515
        %649 = vmatprep.subr.mxu0 %v514
        %650 = vmatpush1.msra.mxu0 %v513
        %651 = vmatprep.subr.mxu0 %v512
        %652 = vmatpush1.msra.mxu0 %v511
        %653 = vmatprep.subr.mxu0 %v510
        %654 = vmatpush1.msra.mxu0 %v509
        %655 = vmatprep.subr.mxu0 %v508
        %656 = vmatpush1.msra.mxu0 %v507
        %657 = vmatprep.subr.mxu0 %v506
        %658 = vmatpush1.msra.mxu0 %v505
        %659 = vmatprep.subr.mxu0 %v504
        %660 = vmatpush1.msra.mxu0 %v503
        %661 = vmatprep.subr.mxu0 %v502
        %662 = vmatpush1.msra.mxu0 %v501
        %663 = vmatprep.subr.mxu0 %v500
        %664 = vmatpush1.msra.mxu0 %v499
        %665 = vmatprep.subr.mxu0 %v498
        %666 = vmatpush1.msra.mxu0 %v497
        %667 = vmatprep.subr.mxu0 %v496
        %668 = vmatpush1.msra.mxu0 %v495
        %669 = vmatprep.subr.mxu0 %v494
        %670 = vmatpush1.msra.mxu0 %v493
        %671 = vmatprep.subr.mxu0 %v492
        %672 = vmatpush1.msra.mxu0 %v491
        %673 = vmatprep.subr.mxu0 0.0
        %674 = vmatpush2.msra.mxu0 0.0
        %675 = vmatprep.subr.mxu0 0.0
        %676 = vmatpush2.msra.mxu0 0.0
        %677 = vmatprep.subr.mxu0 0.0
        %678 = vmatpush2.msra.mxu0 0.0
        %679 = vmatprep.subr.mxu0 0.0
        %680 = vmatpush2.msra.mxu0 0.0
        %681 = vmatprep.subr.mxu0 0.0
        %682 = vmatpush2.msra.mxu0 0.0
        %683 = vmatprep.subr.mxu0 0.0
        %684 = vmatpush2.msra.mxu0 0.0
        %685 = vmatprep.subr.mxu0 0.0
        %686 = vmatpush2.msra.mxu0 0.0
        %687 = vmatprep.subr.mxu0 0.0
        %688 = vmatpush2.msra.mxu0 0.0
        %689 = vmatprep.subr.mxu0 0.0
        %690 = vmatpush2.msra.mxu0 0.0
        %691 = vmatprep.subr.mxu0 0.0
        %692 = vmatpush2.msra.mxu0 0.0
        %693 = vmatprep.subr.mxu0 0.0
        %694 = vmatpush2.msra.mxu0 0.0
        %695 = vmatprep.subr.mxu0 0.0
        %696 = vmatpush2.msra.mxu0 0.0
        %697 = vmatprep.subr.mxu0 0.0
        %698 = vmatpush2.msra.mxu0 0.0
        %699 = vmatprep.subr.mxu0 0.0
        %700 = vmatpush2.msra.mxu0 0.0
        %701 = vmatprep.subr.mxu0 0.0
        %702 = vmatpush2.msra.mxu0 0.0
        %703 = vmatprep.subr.mxu0 0.0
        %704 = vmatpush2.msra.mxu0 0.0
        %705 = vmatprep.mubr.f32.mxu0 0.0
        %706 = vmatmul.mubr.f32.gmra.mxu0 %v443
        %v707 = vpop.f32.mrf.mxu0
        %v708 = vadd.f32 %v619, %v707
        %v709 = vpop.f32.mrf.mxu0
        %v710 = vadd.f32 %v621, %v709
        %711 = vmatprep.mubr.f32.mxu0 0.0
        %712 = vmatmul.mubr.f32.gmra.mxu0 %v444
        %v713 = vpop.f32.mrf.mxu0
        %v714 = vadd.f32 %v625, %v713
        %v715 = vpop.f32.mrf.mxu0
        %v716 = vadd.f32 %v627, %v715
        %717 = vmatprep.mubr.f32.mxu0 0.0
        %718 = vmatmul.mubr.f32.gmra.mxu0 %v445
        %v719 = vpop.f32.mrf.mxu0
        %v720 = vadd.f32 %v631, %v719
        %v721 = vpop.f32.mrf.mxu0
        %v722 = vadd.f32 %v633, %v721
        %723 = vmatprep.mubr.f32.mxu0 0.0
        %724 = vmatmul.mubr.f32.gmra.mxu0 %v446
        %v725 = vpop.f32.mrf.mxu0
        %v726 = vadd.f32 %v637, %v725
        %v727 = vpop.f32.mrf.mxu0
        %v728 = vadd.f32 %v639, %v727
        %729 = vdwg.mxu0
        %v730 = vld [vmem:[%s5] sm:$0xff]
        %v731 = vld [vmem:[%s5 + $0x8] sm:$0xff]
        %v732 = vld [vmem:[%s5 + $0x10] sm:$0x3]
        %v733 = vld [vmem:[%s5 + $0x18] sm:$0x3]
        %v734 = vsel %vm536, %v481, 0
        %v736 = vsel %vm536, %v483, 0
        %v738 = vsel %vm536, %v485, 0
        %v741 = vsel %vm536, %v490, 0
        %v744 = vsel %vm545, %v732, 0
        %v747 = vsel %vm545, %v733, 0
        %749 = vmatprep.subr.mxu0 0.0
        %750 = vmatpush1.msra.mxu0 0.0
        %751 = vmatprep.subr.mxu0 0.0
        %752 = vmatpush1.msra.mxu0 0.0
        %753 = vmatprep.subr.mxu0 0.0
        %754 = vmatpush1.msra.mxu0 0.0
        %755 = vmatprep.subr.mxu0 0.0
        %756 = vmatpush1.msra.mxu0 0.0
        %757 = vmatprep.subr.mxu0 0.0
        %758 = vmatpush1.msra.mxu0 0.0
        %759 = vmatprep.subr.mxu0 0.0
        %760 = vmatpush1.msra.mxu0 0.0
        %761 = vmatprep.subr.mxu0 0.0
        %762 = vmatpush1.msra.mxu0 0.0
        %763 = vmatprep.subr.mxu0 0.0
        %764 = vmatpush1.msra.mxu0 0.0
        %765 = vmatprep.subr.mxu0 0.0
        %766 = vmatpush1.msra.mxu0 0.0
        %767 = vmatprep.subr.mxu0 0.0
        %768 = vmatpush1.msra.mxu0 0.0
        %769 = vmatprep.subr.mxu0 0.0
        %770 = vmatpush1.msra.mxu0 0.0
        %771 = vmatprep.subr.mxu0 0.0
        %772 = vmatpush1.msra.mxu0 0.0
        %773 = vmatprep.subr.mxu0 0.0
        %774 = vmatpush1.msra.mxu0 0.0
        %775 = vmatprep.subr.mxu0 0.0
        %776 = vmatpush1.msra.mxu0 0.0
        %777 = vmatprep.subr.mxu0 %v747
        %778 = vmatpush1.msra.mxu0 %v744
        %779 = vmatprep.subr.mxu0 %v731
        %780 = vmatpush1.msra.mxu0 %v730
        %781 = vmatprep.subr.mxu0 0.0
        %782 = vmatpush2.msra.mxu0 0.0
        %783 = vmatprep.subr.mxu0 0.0
        %784 = vmatpush2.msra.mxu0 0.0
        %785 = vmatprep.subr.mxu0 0.0
        %786 = vmatpush2.msra.mxu0 0.0
        %787 = vmatprep.subr.mxu0 0.0
        %788 = vmatpush2.msra.mxu0 0.0
        %789 = vmatprep.subr.mxu0 0.0
        %790 = vmatpush2.msra.mxu0 0.0
        %791 = vmatprep.subr.mxu0 0.0
        %792 = vmatpush2.msra.mxu0 0.0
        %793 = vmatprep.subr.mxu0 0.0
        %794 = vmatpush2.msra.mxu0 0.0
        %795 = vmatprep.subr.mxu0 0.0
        %796 = vmatpush2.msra.mxu0 0.0
        %797 = vmatprep.subr.mxu0 0.0
        %798 = vmatpush2.msra.mxu0 0.0
        %799 = vmatprep.subr.mxu0 0.0
        %800 = vmatpush2.msra.mxu0 0.0
        %801 = vmatprep.subr.mxu0 0.0
        %802 = vmatpush2.msra.mxu0 0.0
        %803 = vmatprep.subr.mxu0 0.0
        %804 = vmatpush2.msra.mxu0 0.0
        %805 = vmatprep.subr.mxu0 0.0
        %806 = vmatpush2.msra.mxu0 0.0
        %807 = vmatprep.subr.mxu0 0.0
        %808 = vmatpush2.msra.mxu0 0.0
        %809 = vmatprep.subr.mxu0 0.0
        %810 = vmatpush2.msra.mxu0 0.0
        %811 = vmatprep.subr.mxu0 0.0
        %812 = vmatpush2.msra.mxu0 0.0
        %813 = vmatprep.mubr.f32.mxu0 0.0
        %814 = vmatmul.mubr.f32.gmra.mxu0 %v734
        %v815 = vpop.f32.mrf.mxu0
        %v816 = vadd.f32 0.0, %v815
        %v817 = vpop.f32.mrf.mxu0
        %v818 = vadd.f32 0.0, %v817
        %819 = vmatprep.mubr.f32.mxu0 0.0
        %820 = vmatmul.mubr.f32.gmra.mxu0 %v736
        %v821 = vpop.f32.mrf.mxu0
        %v822 = vadd.f32 0.0, %v821
        %v823 = vpop.f32.mrf.mxu0
        %v824 = vadd.f32 0.0, %v823
        %825 = vmatprep.mubr.f32.mxu0 0.0
        %826 = vmatmul.mubr.f32.gmra.mxu0 %v738
        %v827 = vpop.f32.mrf.mxu0
        %v828 = vadd.f32 0.0, %v827
        %v829 = vpop.f32.mrf.mxu0
        %v830 = vadd.f32 0.0, %v829
        %831 = vmatprep.mubr.f32.mxu0 0.0
        %832 = vmatmul.mubr.f32.gmra.mxu0 %v741
        %v833 = vpop.f32.mrf.mxu0
        %v834 = vadd.f32 0.0, %v833
        %v835 = vpop.f32.mrf.mxu0
        %v836 = vadd.f32 0.0, %v835
        %837 = vdwg.mxu0
        %v838 = vadd.f32 %v708, %v816
        %v839 = vadd.f32 %v710, %v818
        %v840 = vadd.f32 %v714, %v822
        %v841 = vadd.f32 %v716, %v824
        %v842 = vadd.f32 %v720, %v828
        %v843 = vadd.f32 %v722, %v830
        %v844 = vadd.f32 %v726, %v834
        %v845 = vadd.f32 %v728, %v836
        %846 = vst [vmem:[%s405] sm:$0xff] %v838
        %vm847 = vcmask 523264
        %848 = vst.msk [vmem:[%s405 + $0x8] sm:$0xff] %vm847, %v839
        %849 = vst [vmem:[%s405 + $0x10] sm:$0xff] %v840
        %850 = vst.msk [vmem:[%s405 + $0x18] sm:$0xff] %vm847, %v841
        %851 = vst [vmem:[%s405 + $0x20] sm:$0xff] %v842
        %852 = vst.msk [vmem:[%s405 + $0x28] sm:$0xff] %vm847, %v843
        %853 = vst [vmem:[%s405 + $0x30] sm:$0xff] %v844
        %854 = vst.msk [vmem:[%s405 + $0x38] sm:$0xff] %vm847, %v845
        %s855 = smul.u32 4, %s28
        %p856 = scmp.lt.s32.totalorder %s27, 1
        %s857 = scalar_select %p856, %s27, 1
        %p858 = scmp.lt.s32.totalorder %s855, 15
        %s859 = scalar_select %p858, %s855, 15
        %s860 = smul.addr %s859, 2
        %s861 = smul.addr %s857, 32
        %s862 = sadd.s32 %s860, %s861
        %s863 = smul.addr %s862, 8
        %s864 = scalar_lea.vmem %s6, %s863
        // Predicated region
        $region53: #{tpu_custom_call.1} parent=43 // pred_check
          %p865 = pneg %p218
        $region54: #{tpu_custom_call.1} parent=43 // pred_check_branch
          %867 = sbr.rel (%p865) target = $region56
        $region55: #{tpu_custom_call.1} parent=43 // pred_region
          %s868 = smul.u32 4, %s28
        $region56: #{tpu_custom_call.1} parent=43 // pred_fallthru
          _
      $region44: #{tpu_custom_call.1} parent=5 // pred_fallthru
        _
      %p869 = scmp.le.s32.totalorder 2, %s18
      // Predicated region
      $region57: #{tpu_custom_call.1} parent=5 // pred_check
        %p870 = pneg %p869
      $region58: #{tpu_custom_call.1} parent=5 // pred_check_branch
        %872 = sbr.rel (%p870) target = $region60
      $region59: #{tpu_custom_call.1} parent=5 // pred_region
        %s873 = ssub.s32 %s18, 2
        // Predicated region
        $region61: #{tpu_custom_call.1} parent=59 // pred_check
          %p874 = pneg %p224
        $region62: #{tpu_custom_call.1} parent=59 // pred_check_branch
          %876 = sbr.rel (%p874) target = $region64
        $region63: #{tpu_custom_call.1} parent=59 // pred_region
          %s877 = smul.u32 4, %s30
          %p878 = scmp.lt.s32.totalorder %s29, 1
          %s879 = scalar_select %p878, %s29, 1
          %p880 = scmp.lt.s32.totalorder %s877, 15
          %s881 = scalar_select %p880, %s877, 15
          %s882 = smul.addr %s881, 2
          %s883 = smul.addr %s879, 32
          %s884 = sadd.s32 %s882, %s883
          %s885 = smul.addr %s884, 8
          %s886 = scalar_lea.vmem %s6, %s885
        $region64: #{tpu_custom_call.1} parent=59 // pred_fallthru
          _
      $region60: #{tpu_custom_call.1} parent=5 // pred_fallthru
        _
    $region6: #{tpu_custom_call.1} parent=1 // loop_footer
      %s22 = sadd.s32 1, %s18
    $region7: #{tpu_custom_call.1} parent=1 // loop_footer_branch
      %17 = sbr.rel target = $region3
    $region8: #{tpu_custom_call.1} parent=1 // loop_exit
      _
    %887 = vsyncpa [#allocation3], 1
    %s888 = scalar_lea.sflag [#allocation3], 1
    %889 = vsyncpa %s888, 1
    %890 = vsyncpa [#allocation5], 1
    %s891 = scalar_lea.sflag [#allocation5], 1
    %892 = vsyncpa %s891, 1

</llo_original>
